<compile_context>
chip_gen: v7x
topology: tpu7x:2x2x1
jax: 0.10.0
libtpu: 0.0.40
codegen_flags: <defaults>
</compile_context>

<pallas_src>
import functools

import jax
import jax.numpy as jnp
from jax.experimental import pallas as pl
from jax.experimental.pallas import tpu as pltpu

EPS = 1e-5


# --------------------------------------------------------------------------------------
# Stage 1: per batch tile -> h = x @ W1 (bf16 MXU, f32 acc), accumulate BN statistics,
#          spill bf16 h to HBM; on the last tile emit folded BN scale/shift vectors.
# --------------------------------------------------------------------------------------
def _stage1_kernel(x_ref, w1_ref, g_ref, beta_ref,          # inputs
                   h_ref, scale_ref, shift_ref,              # outputs
                   sum_ref, ssq_ref,                         # VMEM scratch accumulators
                   *, inv_n):
    i = pl.program_id(0)

    @pl.when(i == 0)
    def _init():
        sum_ref[...] = jnp.zeros_like(sum_ref)
        ssq_ref[...] = jnp.zeros_like(ssq_ref)

    # Linear 1 on the MXU: bf16 inputs, f32 accumulation.
    # b1 is intentionally omitted — it cancels under the BN mean subtraction.
    h = jnp.dot(x_ref[...], w1_ref[...], preferred_element_type=jnp.float32)  # [TM, H] f32

    # BatchNorm batch statistics accumulated in f32 (before any bf16 rounding of h).
    sum_ref[...] += jnp.sum(h, axis=0, keepdims=True)
    ssq_ref[...] += jnp.sum(h * h, axis=0, keepdims=True)

    # Spill pre-BN activation to HBM in bf16 (feeds the stage-2 MXU directly, halves traffic).
    h_ref[...] = h.astype(h_ref.dtype)

    @pl.when(i == pl.num_programs(0) - 1)
    def _finalize():
        mean = sum_ref[...] * inv_n
        var = jnp.maximum(ssq_ref[...] * inv_n - mean * mean, 0.0)  # guard cancellation
        scale = g_ref[...] * jax.lax.rsqrt(var + EPS)               # rsqrt -> EUP (free slot)
        scale_ref[...] = scale
        shift_ref[...] = beta_ref[...] - mean * scale


# --------------------------------------------------------------------------------------
# Stage 2: per batch tile -> one fused f32 scale/shift + ReLU pass, then
#          out = relu(h_bn) @ W2 (bf16 MXU, f32 acc) + b2.
# --------------------------------------------------------------------------------------
def _stage2_kernel(h_ref, scale_ref, shift_ref, w2_ref, b2_ref, o_ref):
    # Folded BN affine: h*scale + shift in a single f32 VPU pass, then ReLU.
    hn = h_ref[...].astype(jnp.float32) * scale_ref[...] + shift_ref[...]
    hn = jnp.maximum(hn, 0.0)

    # Linear 2 on the MXU: bf16 inputs, f32 accumulation.
    out = jnp.dot(hn.astype(w2_ref.dtype), w2_ref[...],
                  preferred_element_type=jnp.float32)
    o_ref[...] = (out + b2_ref[...]).astype(o_ref.dtype)


def projection_mlp_forward(x, w1, b1, gamma, beta, w2, b2, *,
                           block_n=128,
                           vmem_limit_bytes=48 * 1024 * 1024):
    """Forward pass of projection_MLP.

    x:  [N, in_dim] float32
    w1: [in_dim, hidden] (= W1^T), b1: [hidden] (cancelled by BN, accepted for API parity)
    gamma, beta: [hidden] BatchNorm affine params
    w2: [hidden, out_dim] (= W2^T), b2: [out_dim]

    block_n: batch tile (rows per grid step).  Guidance: 128-256 on v5e, 256-512 on v6e
    (raise vmem_limit toward ~96 MiB there if profitable), ~256 on v7x with the 48 MiB limit.
    """
    del b1  # (h + b1) - mean(h + b1) == h - mean(h): exact cancellation under training-mode BN.

    N, D = x.shape
    H = w1.shape[1]
    O = w2.shape[1]
    out_dtype = x.dtype

    block_n = min(block_n, N)
    assert N % block_n == 0 and block_n % 8 == 0, (
        "batch size must be a multiple of block_n (pad the batch before calling)")
    nt = N // block_n

    # bf16 MXU inputs; BN math and accumulation stay in f32.
    x_bf = x.astype(jnp.bfloat16)
    w1_bf = w1.astype(jnp.bfloat16)
    w2_bf = w2.astype(jnp.bfloat16)
    gamma2 = gamma.reshape(1, H).astype(jnp.float32)
    beta2 = beta.reshape(1, H).astype(jnp.float32)
    b2_2 = b2.reshape(1, O).astype(jnp.float32)

    # ---------------- stage 1 ----------------
    ce1 = pl.CostEstimate(
        flops=2 * N * D * H,
        transcendentals=H,
        bytes_accessed=2 * (N * D + D * H + N * H) + 4 * 4 * H,
    )
    h, scale, shift = pl.pallas_call(
        functools.partial(_stage1_kernel, inv_n=1.0 / N),
        out_shape=(
            jax.ShapeDtypeStruct((N, H), jnp.bfloat16),   # pre-BN activation (HBM spill)
            jax.ShapeDtypeStruct((1, H), jnp.float32),    # folded BN scale
            jax.ShapeDtypeStruct((1, H), jnp.float32),    # folded BN shift
        ),
        grid_spec=pltpu.PrefetchScalarGridSpec(
            num_scalar_prefetch=0,
            grid=(nt,),
            in_specs=[
                pl.BlockSpec((block_n, D), lambda i: (i, 0)),   # x tile (pipelined)
                pl.BlockSpec((D, H), lambda i: (0, 0)),         # W1 resident in VMEM
                pl.BlockSpec((1, H), lambda i: (0, 0)),         # gamma resident
                pl.BlockSpec((1, H), lambda i: (0, 0)),         # beta resident
            ],
            out_specs=[
                pl.BlockSpec((block_n, H), lambda i: (i, 0)),   # h tile
                pl.BlockSpec((1, H), lambda i: (0, 0)),         # scale (written on last tile)
                pl.BlockSpec((1, H), lambda i: (0, 0)),         # shift (written on last tile)
            ],
            scratch_shapes=[
                pltpu.VMEM((1, H), jnp.float32),                # sum(h)
                pltpu.VMEM((1, H), jnp.float32),                # sum(h^2)
            ],
        ),
        compiler_params=pltpu.CompilerParams(
            dimension_semantics=("arbitrary",),   # statistics accumulate across batch tiles
            vmem_limit_bytes=vmem_limit_bytes,
        ),
        cost_estimate=ce1,
    )(x_bf, w1_bf, gamma2, beta2)

    # ---------------- stage 2 ----------------
    ce2 = pl.CostEstimate(
        flops=2 * N * H * O + 3 * N * H,
        transcendentals=0,
        bytes_accessed=2 * (N * H + H * O) + 4 * (2 * H + O) + 4 * N * O,
    )
    out = pl.pallas_call(
        _stage2_kernel,
        out_shape=jax.ShapeDtypeStruct((N, O), out_dtype),
        grid_spec=pltpu.PrefetchScalarGridSpec(
            num_scalar_prefetch=0,
            grid=(nt,),
            in_specs=[
                pl.BlockSpec((block_n, H), lambda i: (i, 0)),   # h tile (pipelined)
                pl.BlockSpec((1, H), lambda i: (0, 0)),         # scale resident
                pl.BlockSpec((1, H), lambda i: (0, 0)),         # shift resident
                pl.BlockSpec((H, O), lambda i: (0, 0)),         # W2 resident
                pl.BlockSpec((1, O), lambda i: (0, 0)),         # b2 resident
            ],
            out_specs=pl.BlockSpec((block_n, O), lambda i: (i, 0)),
        ),
        compiler_params=pltpu.CompilerParams(
            dimension_semantics=("parallel",),    # independent tiles -> megacore shard on v7x
            vmem_limit_bytes=vmem_limit_bytes,
        ),
        cost_estimate=ce2,
    )(h, scale, shift, w2_bf, b2_2)

    return out


def reference_forward(x, w1, b1, gamma, beta, w2, b2):
    """Pure-JAX f32 reference matching the PyTorch module in training mode (incl. b1)."""
    h = x @ w1 + b1
    mean = jnp.mean(h, axis=0, keepdims=True)
    var = jnp.mean((h - mean) ** 2, axis=0, keepdims=True)
    h = gamma * (h - mean) / jnp.sqrt(var + EPS) + beta
    h = jnp.maximum(h, 0.0)
    return h @ w2 + b2


if __name__ == "__main__":
    # Small shapes consistent with projection_MLP(in_dim, hidden_dim, out_dim),
    # aligned to the TPU (8, 128) tile and giving >1 batch tile so the pipeline is exercised.
    N, IN_DIM, HIDDEN, OUT_DIM = 256, 128, 256, 128

    key = jax.random.PRNGKey(0)
    kx, kw1, kb1, kw2, kb2 = jax.random.split(key, 5)

    x = jax.random.normal(kx, (N, IN_DIM), dtype=jnp.float32)

    # PyTorch-style uniform fan-in init; weights pre-transposed to [in, out].
    bound1 = 1.0 / (IN_DIM ** 0.5)
    w1 = jax.random.uniform(kw1, (IN_DIM, HIDDEN), jnp.float32, -bound1, bound1)
    b1 = jax.random.uniform(kb1, (HIDDEN,), jnp.float32, -bound1, bound1)

    # Fresh BatchNorm1d affine params.
    gamma = jnp.ones((HIDDEN,), dtype=jnp.float32)
    beta = jnp.zeros((HIDDEN,), dtype=jnp.float32)

    bound2 = 1.0 / (HIDDEN ** 0.5)
    w2 = jax.random.uniform(kw2, (HIDDEN, OUT_DIM), jnp.float32, -bound2, bound2)
    b2 = jax.random.uniform(kb2, (OUT_DIM,), jnp.float32, -bound2, bound2)

    out = projection_mlp_forward(x, w1, b1, gamma, beta, w2, b2, block_n=128)
    out = jax.block_until_ready(out)

    ref = reference_forward(x, w1, b1, gamma, beta, w2, b2)
    assert out.shape == (N, OUT_DIM)

    # bf16 MXU inputs (f32 accumulation) -> compare against the full-f32 reference with a
    # bf16-level tolerance.
    max_err = float(jnp.max(jnp.abs(out - ref)))
    assert jnp.allclose(out, ref, atol=5e-2, rtol=5e-2), f"mismatch vs reference (max abs err {max_err})"

    # TODO(synk): BatchNorm1d running-mean/var buffer updates (training bookkeeping) are not
    # emitted; only the forward math (batch statistics) is reproduced.
    print("KERNEL_OK")
</pallas_src>

<mosaic_0001>
module attributes {stable_mosaic.version = 11 : i64} {
  func.func @_stage1_kernel(%arg0: i32, %arg1: memref<128x128xbf16, #tpu.memory_space<vmem>>, %arg2: memref<128x256xbf16, #tpu.memory_space<vmem>>, %arg3: memref<1x256xf32, #tpu.memory_space<vmem>>, %arg4: memref<1x256xf32, #tpu.memory_space<vmem>>, %arg5: memref<128x256xbf16, #tpu.memory_space<vmem>>, %arg6: memref<1x256xf32, #tpu.memory_space<vmem>>, %arg7: memref<1x256xf32, #tpu.memory_space<vmem>>, %arg8: memref<1x256xf32, #tpu.memory_space<vmem>>, %arg9: memref<1x256xf32, #tpu.memory_space<vmem>>) attributes {dimension_semantics = [#tpu.dimension_semantics<arbitrary>], iteration_bounds = array<i64: 2>, scalar_prefetch = 0 : i64, scratch_operands = 2 : i64, tpu.core_type = #tpu.core_type<tc>, window_params = [{transform_indices = @transform_0, window_bounds = array<i64: 128, 128>}, {pipeline_mode = #tpu.pipeline_mode<synchronous>, transform_indices = @transform_1, window_bounds = array<i64: 128, 256>}, {pipeline_mode = #tpu.pipeline_mode<synchronous>, transform_indices = @transform_2, window_bounds = array<i64: 1, 256>}, {pipeline_mode = #tpu.pipeline_mode<synchronous>, transform_indices = @transform_3, window_bounds = array<i64: 1, 256>}, {transform_indices = @transform_4, window_bounds = array<i64: 128, 256>}, {pipeline_mode = #tpu.pipeline_mode<synchronous>, transform_indices = @transform_5, window_bounds = array<i64: 1, 256>}, {pipeline_mode = #tpu.pipeline_mode<synchronous>, transform_indices = @transform_6, window_bounds = array<i64: 1, 256>}]} {
    %c0_i32 = arith.constant 0 : i32
    %0 = arith.cmpi eq, %arg0, %c0_i32 : i32
    %1 = arith.extui %0 : i1 to i32
    %c0_i32_0 = arith.constant 0 : i32
    %2 = arith.cmpi ne, %1, %c0_i32_0 : i32
    scf.if %2 {
      %cst_17 = arith.constant 0.000000e+00 : f32
      %22 = vector.broadcast %cst_17 : f32 to vector<1x256xf32>
      %c0_18 = arith.constant 0 : index
      %c0_19 = arith.constant 0 : index
      %23 = vector.load %arg8[%c0_18, %c0_19] : memref<1x256xf32, #tpu.memory_space<vmem>>, vector<1x256xf32>
      tpu.vector_store %arg8[%c0_18, %c0_19], %22 {strides = array<i32>} : memref<1x256xf32, #tpu.memory_space<vmem>>, vector<1x256xf32>,
      %cst_20 = arith.constant 0.000000e+00 : f32
      %24 = vector.broadcast %cst_20 : f32 to vector<1x256xf32>
      %c0_21 = arith.constant 0 : index
      %c0_22 = arith.constant 0 : index
      %25 = vector.load %arg9[%c0_21, %c0_22] : memref<1x256xf32, #tpu.memory_space<vmem>>, vector<1x256xf32>
      tpu.vector_store %arg9[%c0_21, %c0_22], %24 {strides = array<i32>} : memref<1x256xf32, #tpu.memory_space<vmem>>, vector<1x256xf32>,
    } else {
    }
    %c0 = arith.constant 0 : index
    %c0_1 = arith.constant 0 : index
    %3 = vector.load %arg1[%c0, %c0_1] : memref<128x128xbf16, #tpu.memory_space<vmem>>, vector<128x128xbf16>
    %c0_2 = arith.constant 0 : index
    %c0_3 = arith.constant 0 : index
    %4 = vector.load %arg2[%c0_2, %c0_3] : memref<128x256xbf16, #tpu.memory_space<vmem>>, vector<128x256xbf16>
    %cst = arith.constant dense<0.000000e+00> : vector<128x256xf32>
    %5 = tpu.matmul %3, %4, %cst {dimension_numbers = #tpu.dot_dimension_numbers<[1], [0], [0], [1], [0, 0, 1, 1], [], []>} : vector<128x128xbf16>, vector<128x256xbf16>, vector<128x256xf32> -> vector<128x256xf32>
    %c0_4 = arith.constant 0 : index
    %c0_5 = arith.constant 0 : index
    %6 = vector.load %arg8[%c0_4, %c0_5] : memref<1x256xf32, #tpu.memory_space<vmem>>, vector<1x256xf32>
    %cst_6 = arith.constant dense<0.000000e+00> : vector<256xf32>
    %7 = vector.multi_reduction <add>, %5, %cst_6 [0] : vector<128x256xf32> to vector<256xf32>
    %8 = vector.shape_cast %7 : vector<256xf32> to vector<1x256xf32>
    %9 = arith.addf %6, %8 : vector<1x256xf32>
    %c0_7 = arith.constant 0 : index
    %c0_8 = arith.constant 0 : index
    %10 = vector.load %arg8[%c0_7, %c0_8] : memref<1x256xf32, #tpu.memory_space<vmem>>, vector<1x256xf32>
    tpu.vector_store %arg8[%c0_7, %c0_8], %9 {strides = array<i32>} : memref<1x256xf32, #tpu.memory_space<vmem>>, vector<1x256xf32>,
    %c0_9 = arith.constant 0 : index
    %c0_10 = arith.constant 0 : index
    %11 = vector.load %arg9[%c0_9, %c0_10] : memref<1x256xf32, #tpu.memory_space<vmem>>, vector<1x256xf32>
    %12 = arith.mulf %5, %5 : vector<128x256xf32>
    %cst_11 = arith.constant dense<0.000000e+00> : vector<256xf32>
    %13 = vector.multi_reduction <add>, %12, %cst_11 [0] : vector<128x256xf32> to vector<256xf32>
    %14 = vector.shape_cast %13 : vector<256xf32> to vector<1x256xf32>
    %15 = arith.addf %11, %14 : vector<1x256xf32>
    %c0_12 = arith.constant 0 : index
    %c0_13 = arith.constant 0 : index
    %16 = vector.load %arg9[%c0_12, %c0_13] : memref<1x256xf32, #tpu.memory_space<vmem>>, vector<1x256xf32>
    tpu.vector_store %arg9[%c0_12, %c0_13], %15 {strides = array<i32>} : memref<1x256xf32, #tpu.memory_space<vmem>>, vector<1x256xf32>,
    %17 = arith.truncf %5 : vector<128x256xf32> to vector<128x256xbf16>
    %c0_14 = arith.constant 0 : index
    %c0_15 = arith.constant 0 : index
    %18 = vector.load %arg5[%c0_14, %c0_15] : memref<128x256xbf16, #tpu.memory_space<vmem>>, vector<128x256xbf16>
    tpu.vector_store %arg5[%c0_14, %c0_15], %17 {strides = array<i32>} : memref<128x256xbf16, #tpu.memory_space<vmem>>, vector<128x256xbf16>,
    %c1_i32 = arith.constant 1 : i32
    %19 = arith.cmpi eq, %arg0, %c1_i32 : i32
    %20 = arith.extui %19 : i1 to i32
    %c0_i32_16 = arith.constant 0 : i32
    %21 = arith.cmpi ne, %20, %c0_i32_16 : i32
    scf.if %21 {
      %c0_17 = arith.constant 0 : index
      %c0_18 = arith.constant 0 : index
      %22 = vector.load %arg8[%c0_17, %c0_18] : memref<1x256xf32, #tpu.memory_space<vmem>>, vector<1x256xf32>
      %cst_19 = arith.constant 3.906250e-03 : f32
      %23 = vector.broadcast %cst_19 : f32 to vector<1x256xf32>
      %24 = arith.mulf %22, %23 : vector<1x256xf32>
      %c0_20 = arith.constant 0 : index
      %c0_21 = arith.constant 0 : index
      %25 = vector.load %arg9[%c0_20, %c0_21] : memref<1x256xf32, #tpu.memory_space<vmem>>, vector<1x256xf32>
      %cst_22 = arith.constant 3.906250e-03 : f32
      %26 = vector.broadcast %cst_22 : f32 to vector<1x256xf32>
      %27 = arith.mulf %25, %26 : vector<1x256xf32>
      %28 = arith.mulf %24, %24 : vector<1x256xf32>
      %29 = arith.subf %27, %28 : vector<1x256xf32>
      %cst_23 = arith.constant 0.000000e+00 : f32
      %30 = vector.broadcast %cst_23 : f32 to vector<1x256xf32>
      %31 = arith.maximumf %29, %30 : vector<1x256xf32>
      %c0_24 = arith.constant 0 : index
      %c0_25 = arith.constant 0 : index
      %32 = vector.load %arg3[%c0_24, %c0_25] : memref<1x256xf32, #tpu.memory_space<vmem>>, vector<1x256xf32>
      %cst_26 = arith.constant 9.99999974E-6 : f32
      %33 = vector.broadcast %cst_26 : f32 to vector<1x256xf32>
      %34 = arith.addf %31, %33 : vector<1x256xf32>
      %35 = math.rsqrt %34 : vector<1x256xf32>
      %36 = arith.mulf %32, %35 : vector<1x256xf32>
      %c0_27 = arith.constant 0 : index
      %c0_28 = arith.constant 0 : index
      %37 = vector.load %arg6[%c0_27, %c0_28] : memref<1x256xf32, #tpu.memory_space<vmem>>, vector<1x256xf32>
      tpu.vector_store %arg6[%c0_27, %c0_28], %36 {strides = array<i32>} : memref<1x256xf32, #tpu.memory_space<vmem>>, vector<1x256xf32>,
      %c0_29 = arith.constant 0 : index
      %c0_30 = arith.constant 0 : index
      %38 = vector.load %arg4[%c0_29, %c0_30] : memref<1x256xf32, #tpu.memory_space<vmem>>, vector<1x256xf32>
      %39 = arith.mulf %24, %36 : vector<1x256xf32>
      %40 = arith.subf %38, %39 : vector<1x256xf32>
      %c0_31 = arith.constant 0 : index
      %c0_32 = arith.constant 0 : index
      %41 = vector.load %arg7[%c0_31, %c0_32] : memref<1x256xf32, #tpu.memory_space<vmem>>, vector<1x256xf32>
      tpu.vector_store %arg7[%c0_31, %c0_32], %40 {strides = array<i32>} : memref<1x256xf32, #tpu.memory_space<vmem>>, vector<1x256xf32>,
    } else {
    }
    return
  }
  func.func @transform_0(%arg0: i32) -> (i32, i32) {
    %c0_i32 = arith.constant 0 : i32
    %c0_i32_0 = arith.constant 0 : i32
    return %arg0, %c0_i32 : i32, i32
  }
  func.func @transform_1(%arg0: i32) -> (i32, i32) {
    %c0_i32 = arith.constant 0 : i32
    %c0_i32_0 = arith.constant 0 : i32
    %c0_i32_1 = arith.constant 0 : i32
    return %c0_i32, %c0_i32_0 : i32, i32
  }
  func.func @transform_2(%arg0: i32) -> (i32, i32) {
    %c0_i32 = arith.constant 0 : i32
    %c0_i32_0 = arith.constant 0 : i32
    %c0_i32_1 = arith.constant 0 : i32
    return %c0_i32, %c0_i32_0 : i32, i32
  }
  func.func @transform_3(%arg0: i32) -> (i32, i32) {
    %c0_i32 = arith.constant 0 : i32
    %c0_i32_0 = arith.constant 0 : i32
    %c0_i32_1 = arith.constant 0 : i32
    return %c0_i32, %c0_i32_0 : i32, i32
  }
  func.func @transform_4(%arg0: i32) -> (i32, i32) {
    %c0_i32 = arith.constant 0 : i32
    %c0_i32_0 = arith.constant 0 : i32
    return %arg0, %c0_i32 : i32, i32
  }
  func.func @transform_5(%arg0: i32) -> (i32, i32) {
    %c0_i32 = arith.constant 0 : i32
    %c0_i32_0 = arith.constant 0 : i32
    %c0_i32_1 = arith.constant 0 : i32
    return %c0_i32, %c0_i32_0 : i32, i32
  }
  func.func @transform_6(%arg0: i32) -> (i32, i32) {
    %c0_i32 = arith.constant 0 : i32
    %c0_i32_0 = arith.constant 0 : i32
    %c0_i32_1 = arith.constant 0 : i32
    return %c0_i32, %c0_i32_0 : i32, i32
  }
}

</mosaic_0001>

<llo_original>
// kernel: tpu_custom_call.1
$region0: #{tpu_custom_call.1}
  #allocation0 [shape = 'u32[]', space=smem, size = 0x4, offset = 0x4, fixed_abs, tag = 'smem constant byte address 0x4 - core index']
  #allocation1 [shape = 'u32[144,128]{1,0:T(1,128)}', space=vmem, size = 0x12000, scoped, tag = 'internal scratch']
  #allocation2 [shape = 'f32[1,256]{1,0:T(1,128)}', space=vmem, size = 0x400, scoped, tag = 'scratch operand']
  #allocation3 [shape = 'f32[1,256]{1,0:T(1,128)}', space=vmem, size = 0x400, scoped, tag = 'scratch operand']
  %s0 = inlined_call_operand.hbm [shape: bf16[256,128], index: 0, kind: input, shape index: {}]
  %s1 = inlined_call_operand.hbm [shape: bf16[128,256], index: 1, kind: input, shape index: {}]
  %s2 = inlined_call_operand.vmem [shape: f32[1,256], index: 2, kind: input, shape index: {}]
  %s3 = inlined_call_operand.vmem [shape: f32[1,256], index: 3, kind: input, shape index: {}]
  %s4 = inlined_call_operand.hbm [shape: bf16[256,256], index: 4, kind: output, shape index: {0}]
  %s5 = inlined_call_operand.hbm [shape: f32[1,256], index: 5, kind: output, shape index: {1}]
  %s6 = inlined_call_operand.hbm [shape: f32[1,256], index: 6, kind: output, shape index: {2}]
  %7 = xla_tuple %s4, %s5, %s6
  %s8 = sld [smem:[#allocation0]]
  $region81: #{tpu_custom_call.1} parent=0
    _
  %s10 = ssub.s32 1, %s8
  %s11 = scalar_select 0, %s10, %s8
  $region1: #{tpu_custom_call.1} parent=0
    #allocation4 [shape = 'u8[65536]{0}', space=vmem, size = 0x10000, scoped, tag = 'input window, operand 0']
    #allocation5 [shape = 's32[2]{0}', space=sflag, size = 0x8, scoped, tag = 'scoped memory for tpu_custom_call.1']
    #allocation6 [shape = 's32[2]{0}', space=sflag, size = 0x8, scoped, tag = 'scoped memory for tpu_custom_call.1']
    #allocation7 [shape = 'u8[65536]{0}', space=vmem, size = 0x10000, scoped, tag = 'input window, operand 1, single buffered']
    #allocation8 [shape = 's32[1]{0}', space=sflag, size = 0x4, scoped, tag = 'scoped memory for tpu_custom_call.1']
    #allocation9 [shape = 'u8[131072]{0}', space=vmem, size = 0x20000, scoped, tag = 'output window, operand 0']
    #allocation10 [shape = 'u8[1024]{0}', space=vmem, size = 0x400, scoped, tag = 'output window, operand 1, single buffered']
    #allocation11 [shape = 's32[1]{0}', space=sflag, size = 0x4, scoped, tag = 'scoped memory for tpu_custom_call.1']
    #allocation12 [shape = 'u8[1024]{0}', space=vmem, size = 0x400, scoped, tag = 'output window, operand 2, single buffered']
    %12 = vsyncpa [#allocation5], 0
    %s13 = scalar_lea.sflag [#allocation5], 1
    %14 = vsyncpa %s13, 0
    %15 = vsyncpa [#allocation8], 0
    %16 = vsyncpa [#allocation6], 0
    %s17 = scalar_lea.sflag [#allocation6], 1
    %18 = vsyncpa %s17, 0
    %19 = vsyncpa [#allocation11], 0
    loop: start=0, step=1, limit=4
    $region2: #{tpu_custom_call.1} parent=1 // loop_pre_header
      _
    $region3: #{tpu_custom_call.1} parent=1 // loop_header
      %s21 = sphi 0, %s25
      %p22 = scmp.ge.s32.totalorder %s21, 4
      %s31 = sphi 0, %s33
      %s34 = sphi 0, %s31
      %s35 = sphi 0, %s34
      %s51 = sphi 0, %s35
      %s55 = sphi 0, %s55
      %s57 = sphi 0, %s55
      %s58 = sphi 0, %s57
      %s72 = sphi 0, %s58
      %s76 = sphi 0, %s76
      %s78 = sphi 0, %s76
      %s79 = sphi 0, %s78
      %s93 = sphi 0, %s79
      %s97 = sphi 0, %s97
      %s99 = sphi 0, %s97
      %s100 = sphi 0, %s99
      %s114 = sphi 0, %s100
      %s120 = sphi 0, %s122
      %s123 = sphi 0, %s120
      %s124 = sphi 0, %s123
      %s140 = sphi 0, %s124
      %s144 = sphi 0, %s144
      %s146 = sphi 0, %s144
      %s147 = sphi 0, %s146
      %s161 = sphi 0, %s147
      %s165 = sphi 0, %s165
      %s167 = sphi 0, %s165
      %s168 = sphi 0, %s167
      %s182 = sphi 0, %s168
    $region4: #{tpu_custom_call.1} parent=1 // loop_header_branch
      %24 = sbr.rel (%p22) target = $region8
    $region5: #{tpu_custom_call.1} parent=1 // loop_body
      %s26 = ssub.s32 %s21, 1
      %s27 = ssub.s32 %s21, 2
      %s28 = sadd.s32 %s21, 1
      %s29 = ssub.s32 %s21, %s28
      %p30 = scmp.eq.s32.totalorder %s29, 0
      %s32 = sadd.s32 %s31, 1
      %s33 = scalar_select %p30, %s31, %s32
      %p36 = pneg %p30
      %p37 = scmp.eq.s32.totalorder %s21, 1
      %p38 = por %p36, %p37
      %p39 = scmp.ne.s32.totalorder %s31, %s34
      %p40 = scmp.eq.s32.totalorder %s21, 0
      %p41 = por %p39, %p40
      %p42 = scmp.ne.s32.totalorder %s31, %s34
      %p43 = scmp.eq.s32.totalorder %s26, 1
      %p44 = por %p42, %p43
      %p45 = scmp.ne.s32.totalorder %s34, %s35
      %p46 = scmp.eq.s32.totalorder %s26, 0
      %p47 = por %p45, %p46
      %p48 = scmp.ne.s32.totalorder %s34, %s35
      %p49 = scmp.eq.s32.totalorder %s27, 1
      %p50 = por %p48, %p49
      %p52 = scmp.ne.s32.totalorder %s35, %s51
      %p53 = scmp.eq.s32.totalorder %s27, 0
      %p54 = por %p52, %p53
      %s56 = sadd.s32 %s55, 1
      %p59 = scmp.eq.s32.totalorder %s21, 1
      %p60 = scmp.ne.s32.totalorder %s55, %s57
      %p61 = scmp.eq.s32.totalorder %s21, 0
      %p62 = por %p60, %p61
      %p63 = scmp.ne.s32.totalorder %s55, %s57
      %p64 = scmp.eq.s32.totalorder %s26, 1
      %p65 = por %p63, %p64
      %p66 = scmp.ne.s32.totalorder %s57, %s58
      %p67 = scmp.eq.s32.totalorder %s26, 0
      %p68 = por %p66, %p67
      %p69 = scmp.ne.s32.totalorder %s57, %s58
      %p70 = scmp.eq.s32.totalorder %s27, 1
      %p71 = por %p69, %p70
      %p73 = scmp.ne.s32.totalorder %s58, %s72
      %p74 = scmp.eq.s32.totalorder %s27, 0
      %p75 = por %p73, %p74
      %s77 = sadd.s32 %s76, 1
      %p80 = scmp.eq.s32.totalorder %s21, 1
      %p81 = scmp.ne.s32.totalorder %s76, %s78
      %p82 = scmp.eq.s32.totalorder %s21, 0
      %p83 = por %p81, %p82
      %p84 = scmp.ne.s32.totalorder %s76, %s78
      %p85 = scmp.eq.s32.totalorder %s26, 1
      %p86 = por %p84, %p85
      %p87 = scmp.ne.s32.totalorder %s78, %s79
      %p88 = scmp.eq.s32.totalorder %s26, 0
      %p89 = por %p87, %p88
      %p90 = scmp.ne.s32.totalorder %s78, %s79
      %p91 = scmp.eq.s32.totalorder %s27, 1
      %p92 = por %p90, %p91
      %p94 = scmp.ne.s32.totalorder %s79, %s93
      %p95 = scmp.eq.s32.totalorder %s27, 0
      %p96 = por %p94, %p95
      %s98 = sadd.s32 %s97, 1
      %p101 = scmp.eq.s32.totalorder %s21, 1
      %p102 = scmp.ne.s32.totalorder %s97, %s99
      %p103 = scmp.eq.s32.totalorder %s21, 0
      %p104 = por %p102, %p103
      %p105 = scmp.ne.s32.totalorder %s97, %s99
      %p106 = scmp.eq.s32.totalorder %s26, 1
      %p107 = por %p105, %p106
      %p108 = scmp.ne.s32.totalorder %s99, %s100
      %p109 = scmp.eq.s32.totalorder %s26, 0
      %p110 = por %p108, %p109
      %p111 = scmp.ne.s32.totalorder %s99, %s100
      %p112 = scmp.eq.s32.totalorder %s27, 1
      %p113 = por %p111, %p112
      %p115 = scmp.ne.s32.totalorder %s100, %s114
      %p116 = scmp.eq.s32.totalorder %s27, 0
      %p117 = por %p115, %p116
      %s118 = ssub.s32 %s21, %s28
      %p119 = scmp.eq.s32.totalorder %s118, 0
      %s121 = sadd.s32 %s120, 1
      %s122 = scalar_select %p119, %s120, %s121
      %p125 = pneg %p119
      %p126 = scmp.eq.s32.totalorder %s21, 1
      %p127 = por %p125, %p126
      %p128 = scmp.ne.s32.totalorder %s120, %s123
      %p129 = scmp.eq.s32.totalorder %s21, 0
      %p130 = por %p128, %p129
      %p131 = scmp.ne.s32.totalorder %s120, %s123
      %p132 = scmp.eq.s32.totalorder %s26, 1
      %p133 = por %p131, %p132
      %p134 = scmp.ne.s32.totalorder %s123, %s124
      %p135 = scmp.eq.s32.totalorder %s26, 0
      %p136 = por %p134, %p135
      %p137 = scmp.ne.s32.totalorder %s123, %s124
      %p138 = scmp.eq.s32.totalorder %s27, 1
      %p139 = por %p137, %p138
      %p141 = scmp.ne.s32.totalorder %s124, %s140
      %p142 = scmp.eq.s32.totalorder %s27, 0
      %p143 = por %p141, %p142
      %s145 = sadd.s32 %s144, 1
      %p148 = scmp.eq.s32.totalorder %s21, 1
      %p149 = scmp.ne.s32.totalorder %s144, %s146
      %p150 = scmp.eq.s32.totalorder %s21, 0
      %p151 = por %p149, %p150
      %p152 = scmp.ne.s32.totalorder %s144, %s146
      %p153 = scmp.eq.s32.totalorder %s26, 1
      %p154 = por %p152, %p153
      %p155 = scmp.ne.s32.totalorder %s146, %s147
      %p156 = scmp.eq.s32.totalorder %s26, 0
      %p157 = por %p155, %p156
      %p158 = scmp.ne.s32.totalorder %s146, %s147
      %p159 = scmp.eq.s32.totalorder %s27, 1
      %p160 = por %p158, %p159
      %p162 = scmp.ne.s32.totalorder %s147, %s161
      %p163 = scmp.eq.s32.totalorder %s27, 0
      %p164 = por %p162, %p163
      %s166 = sadd.s32 %s165, 1
      %p169 = scmp.eq.s32.totalorder %s21, 1
      %p170 = scmp.ne.s32.totalorder %s165, %s167
      %p171 = scmp.eq.s32.totalorder %s21, 0
      %p172 = por %p170, %p171
      %p173 = scmp.ne.s32.totalorder %s165, %s167
      %p174 = scmp.eq.s32.totalorder %s26, 1
      %p175 = por %p173, %p174
      %p176 = scmp.ne.s32.totalorder %s167, %s168
      %p177 = scmp.eq.s32.totalorder %s26, 0
      %p178 = por %p176, %p177
      %p179 = scmp.ne.s32.totalorder %s167, %s168
      %p180 = scmp.eq.s32.totalorder %s27, 1
      %p181 = por %p179, %p180
      %p183 = scmp.ne.s32.totalorder %s168, %s182
      %p184 = scmp.eq.s32.totalorder %s27, 0
      %p185 = por %p183, %p184
      %p186 = scmp.le.s32.totalorder 1, %s21
      %p187 = scmp.lt.s32.totalorder %s21, 3
      %p188 = pnand %p186, %p187
      %p189 = pneg %p188
      // Predicated region
      $region9: #{tpu_custom_call.1} parent=5 // pred_check
        _
      $region10: #{tpu_custom_call.1} parent=5 // pred_check_branch
        %191 = sbr.rel (%p188) target = $region12
      $region11: #{tpu_custom_call.1} parent=5 // pred_region
        %s192 = ssub.s32 %s21, 1
        // Predicated region
        $region13: #{tpu_custom_call.1} parent=11 // pred_check
          %p193 = pneg %p68
        $region14: #{tpu_custom_call.1} parent=11 // pred_check_branch
          %195 = sbr.rel (%p193) target = $region16
        $region15: #{tpu_custom_call.1} parent=11 // pred_region
          %s197 = ssub.s32 2048, 2048
          %198 = vsyncadd [#allocation8], %s197
          %s199 = sshll.u32 [#allocation7], 4
          %s200 = int_to_ptr.vmem [resolvable:$true] %s199
          %205 = dma.hbm_to_vmem [thread:$0]  %s1, 2048, %s200, [#allocation8], 128, 128, 8
        $region16: #{tpu_custom_call.1} parent=11 // pred_fallthru
          _
        // Predicated region
        $region17: #{tpu_custom_call.1} parent=11 // pred_check
          %p206 = pneg %p89
        $region18: #{tpu_custom_call.1} parent=11 // pred_check_branch
          %208 = sbr.rel (%p206) target = $region20
        $region19: #{tpu_custom_call.1} parent=11 // pred_region
          _
        $region20: #{tpu_custom_call.1} parent=11 // pred_fallthru
          _
        // Predicated region
        $region21: #{tpu_custom_call.1} parent=11 // pred_check
          %p209 = pneg %p110
        $region22: #{tpu_custom_call.1} parent=11 // pred_check_branch
          %211 = sbr.rel (%p209) target = $region24
        $region23: #{tpu_custom_call.1} parent=11 // pred_region
          _
        $region24: #{tpu_custom_call.1} parent=11 // pred_fallthru
          _
      $region12: #{tpu_custom_call.1} parent=5 // pred_fallthru
        _
      %p212 = scmp.lt.s32.totalorder %s21, 2
      // Predicated region
      $region25: #{tpu_custom_call.1} parent=5 // pred_check
        %p213 = pneg %p212
      $region26: #{tpu_custom_call.1} parent=5 // pred_check_branch
        %215 = sbr.rel (%p213) target = $region28
      $region27: #{tpu_custom_call.1} parent=5 // pred_region
        // Predicated region
        $region29: #{tpu_custom_call.1} parent=27 // pred_check
          %p216 = pneg %p41
        $region30: #{tpu_custom_call.1} parent=27 // pred_check_branch
          %218 = sbr.rel (%p216) target = $region32
        $region31: #{tpu_custom_call.1} parent=27 // pred_region
          %s219 = sand.u32 %s31, 1
          %s220 = scalar_lea.sflag [#allocation5], %s219
          %s221 = sand.u32 %s31, 1
          %s222 = smul.addr %s221, 64
          %s223 = scalar_lea.vmem [#allocation4], %s222
          %s224 = smul.u32 16, %s21
          %s226 = ssub.s32 1024, 1024
          %227 = vsyncadd %s220, %s226
          %s228 = smul.addr %s224, 64
          %s229 = scalar_lea.hbm %s0, %s228
          %s230 = sshll.u32 %s223, 4
          %s231 = int_to_ptr.vmem [resolvable:$true] %s230
          %236 = dma.hbm_to_vmem [thread:$0]  %s229, 1024, %s231, %s220, 64, 64, 4
        $region32: #{tpu_custom_call.1} parent=27 // pred_fallthru
          _
      $region28: #{tpu_custom_call.1} parent=5 // pred_fallthru
        _
      %p237 = scmp.le.s32.totalorder 1, %s21
      %p238 = scmp.lt.s32.totalorder %s21, 3
      %p239 = pnand %p237, %p238
      %p240 = pneg %p239
      // Predicated region
      $region33: #{tpu_custom_call.1} parent=5 // pred_check
        _
      $region34: #{tpu_custom_call.1} parent=5 // pred_check_branch
        %242 = sbr.rel (%p239) target = $region36
      $region35: #{tpu_custom_call.1} parent=5 // pred_region
        %s243 = ssub.s32 %s21, 1
        %s244 = sand.u32 %s34, 1
        %s245 = scalar_lea.sflag [#allocation5], %s244
        %s246 = sand.u32 %s34, 1
        %s247 = smul.addr %s246, 64
        %s248 = scalar_lea.vmem [#allocation4], %s247
        // Predicated region
        $region37: #{tpu_custom_call.1} parent=35 // pred_check
          %p249 = pneg %p47
        $region38: #{tpu_custom_call.1} parent=35 // pred_check_branch
          %251 = sbr.rel (%p249) target = $region40
        $region39: #{tpu_custom_call.1} parent=35 // pred_region
          %252 = dma.done %s245, 1024
        $region40: #{tpu_custom_call.1} parent=35 // pred_fallthru
          _
        // Predicated region
        $region41: #{tpu_custom_call.1} parent=35 // pred_check
          %p253 = pneg %p68
        $region42: #{tpu_custom_call.1} parent=35 // pred_check_branch
          %255 = sbr.rel (%p253) target = $region44
        $region43: #{tpu_custom_call.1} parent=35 // pred_region
          %256 = dma.done [#allocation8], 2048
        $region44: #{tpu_custom_call.1} parent=35 // pred_fallthru
          _
        %s257 = sand.u32 %s34, 1
        %s258 = scalar_lea.sflag [#allocation5], %s257
        %s259 = sand.u32 %s34, 1
        %s260 = smul.addr %s259, 64
        %s261 = scalar_lea.vmem [#allocation4], %s260
        %p262 = pneg %p47
        %p263 = pneg %p44
        %p264 = pneg %p68
        %p265 = pneg %p65
        %p266 = pneg %p89
        %p267 = pneg %p86
        %p268 = pneg %p110
        %p269 = pneg %p107
        %p270 = pneg %p136
        %p271 = pneg %p133
        %s272 = sand.u32 %s123, 1
        %s273 = scalar_lea.sflag [#allocation6], %s272
        %s274 = sand.u32 %s123, 1
        %s275 = smul.addr %s274, 128
        %s276 = scalar_lea.vmem [#allocation9], %s275
        %p277 = pneg %p157
        %p278 = pneg %p154
        %p279 = pneg %p178
        %p280 = pneg %p175
        %s281 = smul.u32 16, %s26
        %s282 = smul.u32 16, %s26
        %p284 = scmp.eq.s32.totalorder %s26, 0
        // Predicated region
        $region45: #{tpu_custom_call.1} parent=35 // pred_check
          %p285 = pneg %p284
        $region46: #{tpu_custom_call.1} parent=35 // pred_check_branch
          %287 = sbr.rel (%p285) target = $region48
        $region47: #{tpu_custom_call.1} parent=35 // pred_region
          %v288 = vlaneseq
          %vm289 = vcmp.ge.s32.totalorder %v288, 0
          %vm290 = vcmp.lt.s32.totalorder %v288, 256
          %vm291 = vmand %vm289, %vm290
          %292 = vst.msk [vmem:[#allocation2] sm:$0x3] %vm291, 0.0
          %293 = vst.msk [vmem:[#allocation3] sm:$0x3] %vm291, 0.0
        $region48: #{tpu_custom_call.1} parent=35 // pred_fallthru
          _
        %v294 = vld [vmem:[%s248] sm:$0xf]
        %v295 = vld [vmem:[%s248 + $0x4] sm:$0xf]
        %v296 = vld [vmem:[%s248 + $0x8] sm:$0xf]
        %v297 = vld [vmem:[%s248 + $0xc] sm:$0xf]
        %v298 = vld [vmem:[%s248 + $0x10] sm:$0xf]
        %v299 = vld [vmem:[%s248 + $0x14] sm:$0xf]
        %v300 = vld [vmem:[%s248 + $0x18] sm:$0xf]
        %v301 = vld [vmem:[%s248 + $0x1c] sm:$0xf]
        %v302 = vld [vmem:[%s248 + $0x20] sm:$0xf]
        %v303 = vld [vmem:[%s248 + $0x24] sm:$0xf]
        %v304 = vld [vmem:[%s248 + $0x28] sm:$0xf]
        %v305 = vld [vmem:[%s248 + $0x2c] sm:$0xf]
        %v306 = vld [vmem:[%s248 + $0x30] sm:$0xf]
        %v307 = vld [vmem:[%s248 + $0x34] sm:$0xf]
        %v308 = vld [vmem:[%s248 + $0x38] sm:$0xf]
        %v309 = vld [vmem:[%s248 + $0x3c] sm:$0xf]
        %v310 = vld [vmem:[#allocation7] sm:$0xff]
        %v311 = vld [vmem:[#allocation7 + $0x8] sm:$0xff]
        %v312 = vld [vmem:[#allocation7 + $0x10] sm:$0xff]
        %v313 = vld [vmem:[#allocation7 + $0x18] sm:$0xff]
        %v314 = vld [vmem:[#allocation7 + $0x20] sm:$0xff]
        %v315 = vld [vmem:[#allocation7 + $0x28] sm:$0xff]
        %v316 = vld [vmem:[#allocation7 + $0x30] sm:$0xff]
        %v317 = vld [vmem:[#allocation7 + $0x38] sm:$0xff]
        %v318 = vld [vmem:[#allocation7 + $0x40] sm:$0xff]
        %v319 = vld [vmem:[#allocation7 + $0x48] sm:$0xff]
        %v320 = vld [vmem:[#allocation7 + $0x50] sm:$0xff]
        %v321 = vld [vmem:[#allocation7 + $0x58] sm:$0xff]
        %v322 = vld [vmem:[#allocation7 + $0x60] sm:$0xff]
        %v323 = vld [vmem:[#allocation7 + $0x68] sm:$0xff]
        %v324 = vld [vmem:[#allocation7 + $0x70] sm:$0xff]
        %v325 = vld [vmem:[#allocation7 + $0x78] sm:$0xff]
        %v342 = vunpack.c.l.b16 %v294
        %v343 = vunpack.c.l.b16 %v295
        %v344 = vunpack.c.l.b16 %v296
        %v345 = vunpack.c.l.b16 %v297
        %v346 = vunpack.c.l.b16 %v298
        %v347 = vunpack.c.l.b16 %v299
        %v348 = vunpack.c.l.b16 %v300
        %v349 = vunpack.c.l.b16 %v301
        %v350 = vunpack.c.l.b16 %v302
        %v351 = vunpack.c.l.b16 %v303
        %v352 = vunpack.c.l.b16 %v304
        %v353 = vunpack.c.l.b16 %v305
        %v354 = vunpack.c.l.b16 %v306
        %v355 = vunpack.c.l.b16 %v307
        %v356 = vunpack.c.l.b16 %v308
        %v357 = vunpack.c.l.b16 %v309
        %v358 = vpack.c.b16 %v343, %v342
        %v359 = vpack.c.b16 %v345, %v344
        %v360 = vpack.c.b16 %v347, %v346
        %v361 = vpack.c.b16 %v349, %v348
        %v362 = vpack.c.b16 %v351, %v350
        %v363 = vpack.c.b16 %v353, %v352
        %v364 = vpack.c.b16 %v355, %v354
        %v365 = vpack.c.b16 %v357, %v356
        %v390 = vunpack.c.l.b16 %v310
        %v391 = vunpack.c.h.b16 %v310
        %v392 = vunpack.c.l.b16 %v311
        %v393 = vunpack.c.h.b16 %v311
        %v394 = vunpack.c.l.b16 %v312
        %v395 = vunpack.c.h.b16 %v312
        %v396 = vunpack.c.l.b16 %v313
        %v397 = vunpack.c.h.b16 %v313
        %v398 = vunpack.c.l.b16 %v314
        %v399 = vunpack.c.h.b16 %v314
        %v400 = vunpack.c.l.b16 %v315
        %v401 = vunpack.c.h.b16 %v315
        %v402 = vunpack.c.l.b16 %v316
        %v403 = vunpack.c.h.b16 %v316
        %v404 = vunpack.c.l.b16 %v317
        %v405 = vunpack.c.h.b16 %v317
        %v406 = vunpack.c.l.b16 %v318
        %v407 = vunpack.c.h.b16 %v318
        %v408 = vunpack.c.l.b16 %v319
        %v409 = vunpack.c.h.b16 %v319
        %v410 = vunpack.c.l.b16 %v320
        %v411 = vunpack.c.h.b16 %v320
        %v412 = vunpack.c.l.b16 %v321
        %v413 = vunpack.c.h.b16 %v321
        %v414 = vunpack.c.l.b16 %v322
        %v415 = vunpack.c.h.b16 %v322
        %v416 = vunpack.c.l.b16 %v323
        %v417 = vunpack.c.h.b16 %v323
        %v418 = vunpack.c.l.b16 %v324
        %v419 = vunpack.c.h.b16 %v324
        %v420 = vunpack.c.l.b16 %v325
        %v421 = vunpack.c.h.b16 %v325
        %v422 = vpack.c.b16 %v392, %v390
        %v423 = vpack.c.b16 %v393, %v391
        %v424 = vpack.c.b16 %v396, %v394
        %v425 = vpack.c.b16 %v397, %v395
        %v426 = vpack.c.b16 %v400, %v398
        %v427 = vpack.c.b16 %v401, %v399
        %v428 = vpack.c.b16 %v404, %v402
        %v429 = vpack.c.b16 %v405, %v403
        %v430 = vpack.c.b16 %v408, %v406
        %v431 = vpack.c.b16 %v409, %v407
        %v432 = vpack.c.b16 %v412, %v410
        %v433 = vpack.c.b16 %v413, %v411
        %v434 = vpack.c.b16 %v416, %v414
        %v435 = vpack.c.b16 %v417, %v415
        %v436 = vpack.c.b16 %v420, %v418
        %v437 = vpack.c.b16 %v421, %v419
        %454 = vmatprep.subr.bf16.mxu0 %v423
        %455 = vmatpush1.bf16.msra.mxu0 %v422
        %456 = vmatprep.subr.bf16.mxu0 %v425
        %457 = vmatpush1.bf16.msra.mxu0 %v424
        %458 = vmatprep.subr.bf16.mxu0 %v427
        %459 = vmatpush1.bf16.msra.mxu0 %v426
        %460 = vmatprep.subr.bf16.mxu0 %v429
        %461 = vmatpush1.bf16.msra.mxu0 %v428
        %462 = vmatprep.subr.bf16.mxu0 %v431
        %463 = vmatpush1.bf16.msra.mxu0 %v430
        %464 = vmatprep.subr.bf16.mxu0 %v433
        %465 = vmatpush1.bf16.msra.mxu0 %v432
        %466 = vmatprep.subr.bf16.mxu0 %v435
        %467 = vmatpush1.bf16.msra.mxu0 %v434
        %468 = vmatprep.subr.bf16.mxu0 %v437
        %469 = vmatpush1.bf16.msra.mxu0 %v436
        %470 = vmatprep.subr.bf16.mxu0 0
        %471 = vmatpush1.bf16.msra.mxu0 0
        %472 = vmatprep.subr.bf16.mxu0 0
        %473 = vmatpush1.bf16.msra.mxu0 0
        %474 = vmatprep.subr.bf16.mxu0 0
        %475 = vmatpush1.bf16.msra.mxu0 0
        %476 = vmatprep.subr.bf16.mxu0 0
        %477 = vmatpush1.bf16.msra.mxu0 0
        %478 = vmatprep.subr.bf16.mxu0 0
        %479 = vmatpush1.bf16.msra.mxu0 0
        %480 = vmatprep.subr.bf16.mxu0 0
        %481 = vmatpush1.bf16.msra.mxu0 0
        %482 = vmatprep.subr.bf16.mxu0 0
        %483 = vmatpush1.bf16.msra.mxu0 0
        %484 = vmatprep.subr.bf16.mxu0 0
        %485 = vmatpush1.bf16.msra.mxu0 0
        %486 = vmatprep.mubr.bf16.mxu0 0
        %487 = vmatmul.mubr.bf16.gmra.mrb[0].mxu0 %v358
        %v488 = vpop.f32.mrb[0].mxu0
        %v489 = vadd.f32 0.0, %v488
        %v490 = vpop.f32.mrb[0].mxu0
        %v491 = vadd.f32 0.0, %v490
        %v492 = vpop.f32.mrb[0].mxu0
        %v493 = vadd.f32 0.0, %v492
        %v494 = vpop.f32.mrb[0].mxu0
        %v495 = vadd.f32 0.0, %v494
        %496 = vmatprep.mubr.bf16.mxu0 0
        %497 = vmatmul.mubr.bf16.gmra.mrb[0].mxu0 %v359
        %v498 = vpop.f32.mrb[0].mxu0
        %v499 = vadd.f32 0.0, %v498
        %v500 = vpop.f32.mrb[0].mxu0
        %v501 = vadd.f32 0.0, %v500
        %v502 = vpop.f32.mrb[0].mxu0
        %v503 = vadd.f32 0.0, %v502
        %v504 = vpop.f32.mrb[0].mxu0
        %v505 = vadd.f32 0.0, %v504
        %506 = vmatprep.mubr.bf16.mxu0 0
        %507 = vmatmul.mubr.bf16.gmra.mrb[0].mxu0 %v360
        %v508 = vpop.f32.mrb[0].mxu0
        %v509 = vadd.f32 0.0, %v508
        %v510 = vpop.f32.mrb[0].mxu0
        %v511 = vadd.f32 0.0, %v510
        %v512 = vpop.f32.mrb[0].mxu0
        %v513 = vadd.f32 0.0, %v512
        %v514 = vpop.f32.mrb[0].mxu0
        %v515 = vadd.f32 0.0, %v514
        %516 = vmatprep.mubr.bf16.mxu0 0
        %517 = vmatmul.mubr.bf16.gmra.mrb[0].mxu0 %v361
        %v518 = vpop.f32.mrb[0].mxu0
        %v519 = vadd.f32 0.0, %v518
        %v520 = vpop.f32.mrb[0].mxu0
        %v521 = vadd.f32 0.0, %v520
        %v522 = vpop.f32.mrb[0].mxu0
        %v523 = vadd.f32 0.0, %v522
        %v524 = vpop.f32.mrb[0].mxu0
        %v525 = vadd.f32 0.0, %v524
        %526 = vmatprep.mubr.bf16.mxu0 0
        %527 = vmatmul.mubr.bf16.gmra.mrb[0].mxu0 %v362
        %v528 = vpop.f32.mrb[0].mxu0
        %v529 = vadd.f32 0.0, %v528
        %v530 = vpop.f32.mrb[0].mxu0
        %v531 = vadd.f32 0.0, %v530
        %v532 = vpop.f32.mrb[0].mxu0
        %v533 = vadd.f32 0.0, %v532
        %v534 = vpop.f32.mrb[0].mxu0
        %v535 = vadd.f32 0.0, %v534
        %536 = vmatprep.mubr.bf16.mxu0 0
        %537 = vmatmul.mubr.bf16.gmra.mrb[0].mxu0 %v363
        %v538 = vpop.f32.mrb[0].mxu0
        %v539 = vadd.f32 0.0, %v538
        %v540 = vpop.f32.mrb[0].mxu0
        %v541 = vadd.f32 0.0, %v540
        %v542 = vpop.f32.mrb[0].mxu0
        %v543 = vadd.f32 0.0, %v542
        %v544 = vpop.f32.mrb[0].mxu0
        %v545 = vadd.f32 0.0, %v544
        %546 = vmatprep.mubr.bf16.mxu0 0
        %547 = vmatmul.mubr.bf16.gmra.mrb[0].mxu0 %v364
        %v548 = vpop.f32.mrb[0].mxu0
        %v549 = vadd.f32 0.0, %v548
        %v550 = vpop.f32.mrb[0].mxu0
        %v551 = vadd.f32 0.0, %v550
        %v552 = vpop.f32.mrb[0].mxu0
        %v553 = vadd.f32 0.0, %v552
        %v554 = vpop.f32.mrb[0].mxu0
        %v555 = vadd.f32 0.0, %v554
        %556 = vmatprep.mubr.bf16.mxu0 0
        %557 = vmatmul.mubr.bf16.gmra.mrb[0].mxu0 %v365
        %v558 = vpop.f32.mrb[0].mxu0
        %v559 = vadd.f32 0.0, %v558
        %v560 = vpop.f32.mrb[0].mxu0
        %v561 = vadd.f32 0.0, %v560
        %v562 = vpop.f32.mrb[0].mxu0
        %v563 = vadd.f32 0.0, %v562
        %v564 = vpop.f32.mrb[0].mxu0
        %v565 = vadd.f32 0.0, %v564
        %566 = vdwg.mxu0
        %v567 = vld [vmem:[#allocation2] sm:$0x3]
        %v568 = vadd.f32 %v489, %v493
        %v569 = vadd.f32 %v568, %v499
        %v570 = vadd.f32 %v569, %v503
        %v571 = vadd.f32 %v570, %v509
        %v572 = vadd.f32 %v571, %v513
        %v573 = vadd.f32 %v572, %v519
        %v574 = vadd.f32 %v573, %v523
        %v575 = vadd.f32 %v574, %v529
        %v576 = vadd.f32 %v575, %v533
        %v577 = vadd.f32 %v576, %v539
        %v578 = vadd.f32 %v577, %v543
        %v579 = vadd.f32 %v578, %v549
        %v580 = vadd.f32 %v579, %v553
        %v581 = vadd.f32 %v580, %v559
        %v582 = vadd.f32 %v581, %v563
        %v583 = vrot.slane %v582, 4
        %v584 = vadd.f32 %v582, %v583
        %v585 = vrot.slane %v584, 2
        %v586 = vadd.f32 %v584, %v585
        %v587 = vrot.slane %v586, 1
        %v588 = vadd.f32 %v586, %v587
        %v589 = vadd.f32 %v491, %v495
        %v590 = vadd.f32 %v589, %v501
        %v591 = vadd.f32 %v590, %v505
        %v592 = vadd.f32 %v591, %v511
        %v593 = vadd.f32 %v592, %v515
        %v594 = vadd.f32 %v593, %v521
        %v595 = vadd.f32 %v594, %v525
        %v596 = vadd.f32 %v595, %v531
        %v597 = vadd.f32 %v596, %v535
        %v598 = vadd.f32 %v597, %v541
        %v599 = vadd.f32 %v598, %v545
        %v600 = vadd.f32 %v599, %v551
        %v601 = vadd.f32 %v600, %v555
        %v602 = vadd.f32 %v601, %v561
        %v603 = vadd.f32 %v602, %v565
        %v604 = vrot.slane %v603, 4
        %v605 = vadd.f32 %v603, %v604
        %v606 = vrot.slane %v605, 2
        %v607 = vadd.f32 %v605, %v606
        %v608 = vrot.slane %v607, 1
        %v609 = vadd.f32 %v607, %v608
        %v612 = vcombine.low %v588, %v609
        %v614 = vunpack.c.l.s4 1966171168
        %v615 = vunpack.c.0.s8 %v614
        %v616 = vlaneseq
        %v617 = vshrl.u32 %v616, 7
        %v618 = vsub.s32 %v615, %v617
        %v619 = vrot.slane %v612, %v618
        %v621 = vunpack.c.l.s4 1966171168
        %v622 = vunpack.c.0.s8 %v621
        %v623 = vlaneseq
        %v624 = vshrl.u32 %v623, 7
        %v625 = vsub.s32 %v622, %v624
        %v626 = vrot.slane %v619, %v625
        %v628 = vadd.f32 %v567, %v626
        %v629 = vlaneseq
        %vm630 = vcmp.ge.s32.totalorder %v629, 0
        %vm631 = vcmp.lt.s32.totalorder %v629, 256
        %vm632 = vmand %vm630, %vm631
        %633 = vst.msk [vmem:[#allocation2] sm:$0x3] %vm632, %v628
        %v634 = vld [vmem:[#allocation3] sm:$0x3]
        %v635 = vmul.f32 %v489, %v489
        %v636 = vmul.f32 %v491, %v491
        %v637 = vmul.f32 %v493, %v493
        %v638 = vmul.f32 %v495, %v495
        %v639 = vmul.f32 %v499, %v499
        %v640 = vmul.f32 %v501, %v501
        %v641 = vmul.f32 %v503, %v503
        %v642 = vmul.f32 %v505, %v505
        %v643 = vmul.f32 %v509, %v509
        %v644 = vmul.f32 %v511, %v511
        %v645 = vmul.f32 %v513, %v513
        %v646 = vmul.f32 %v515, %v515
        %v647 = vmul.f32 %v519, %v519
        %v648 = vmul.f32 %v521, %v521
        %v649 = vmul.f32 %v523, %v523
        %v650 = vmul.f32 %v525, %v525
        %v651 = vmul.f32 %v529, %v529
        %v652 = vmul.f32 %v531, %v531
        %v653 = vmul.f32 %v533, %v533
        %v654 = vmul.f32 %v535, %v535
        %v655 = vmul.f32 %v539, %v539
        %v656 = vmul.f32 %v541, %v541
        %v657 = vmul.f32 %v543, %v543
        %v658 = vmul.f32 %v545, %v545
        %v659 = vmul.f32 %v549, %v549
        %v660 = vmul.f32 %v551, %v551
        %v661 = vmul.f32 %v553, %v553
        %v662 = vmul.f32 %v555, %v555
        %v663 = vmul.f32 %v559, %v559
        %v664 = vmul.f32 %v561, %v561
        %v665 = vmul.f32 %v563, %v563
        %v666 = vmul.f32 %v565, %v565
        %v667 = vadd.f32 %v635, %v637
        %v668 = vadd.f32 %v667, %v639
        %v669 = vadd.f32 %v668, %v641
        %v670 = vadd.f32 %v669, %v643
        %v671 = vadd.f32 %v670, %v645
        %v672 = vadd.f32 %v671, %v647
        %v673 = vadd.f32 %v672, %v649
        %v674 = vadd.f32 %v673, %v651
        %v675 = vadd.f32 %v674, %v653
        %v676 = vadd.f32 %v675, %v655
        %v677 = vadd.f32 %v676, %v657
        %v678 = vadd.f32 %v677, %v659
        %v679 = vadd.f32 %v678, %v661
        %v680 = vadd.f32 %v679, %v663
        %v681 = vadd.f32 %v680, %v665
        %v682 = vrot.slane %v681, 4
        %v683 = vadd.f32 %v681, %v682
        %v684 = vrot.slane %v683, 2
        %v685 = vadd.f32 %v683, %v684
        %v686 = vrot.slane %v685, 1
        %v687 = vadd.f32 %v685, %v686
        %v688 = vadd.f32 %v636, %v638
        %v689 = vadd.f32 %v688, %v640
        %v690 = vadd.f32 %v689, %v642
        %v691 = vadd.f32 %v690, %v644
        %v692 = vadd.f32 %v691, %v646
        %v693 = vadd.f32 %v692, %v648
        %v694 = vadd.f32 %v693, %v650
        %v695 = vadd.f32 %v694, %v652
        %v696 = vadd.f32 %v695, %v654
        %v697 = vadd.f32 %v696, %v656
        %v698 = vadd.f32 %v697, %v658
        %v699 = vadd.f32 %v698, %v660
        %v700 = vadd.f32 %v699, %v662
        %v701 = vadd.f32 %v700, %v664
        %v702 = vadd.f32 %v701, %v666
        %v703 = vrot.slane %v702, 4
        %v704 = vadd.f32 %v702, %v703
        %v705 = vrot.slane %v704, 2
        %v706 = vadd.f32 %v704, %v705
        %v707 = vrot.slane %v706, 1
        %v708 = vadd.f32 %v706, %v707
        %v711 = vcombine.low %v687, %v708
        %v713 = vunpack.c.l.s4 1966171168
        %v714 = vunpack.c.0.s8 %v713
        %v715 = vlaneseq
        %v716 = vshrl.u32 %v715, 7
        %v717 = vsub.s32 %v714, %v716
        %v718 = vrot.slane %v711, %v717
        %v720 = vunpack.c.l.s4 1966171168
        %v721 = vunpack.c.0.s8 %v720
        %v722 = vlaneseq
        %v723 = vshrl.u32 %v722, 7
        %v724 = vsub.s32 %v721, %v723
        %v725 = vrot.slane %v718, %v724
        %v727 = vadd.f32 %v634, %v725
        %728 = vst.msk [vmem:[#allocation3] sm:$0x3] %vm632, %v727
        %v729 = vpack.c.bf16 %v493, %v489
        %v730 = vpack.c.bf16 %v495, %v491
        %v731 = vpack.c.bf16 %v503, %v499
        %v732 = vpack.c.bf16 %v505, %v501
        %v733 = vpack.c.bf16 %v513, %v509
        %v734 = vpack.c.bf16 %v515, %v511
        %v735 = vpack.c.bf16 %v523, %v519
        %v736 = vpack.c.bf16 %v525, %v521
        %v737 = vpack.c.bf16 %v533, %v529
        %v738 = vpack.c.bf16 %v535, %v531
        %v739 = vpack.c.bf16 %v543, %v539
        %v740 = vpack.c.bf16 %v545, %v541
        %v741 = vpack.c.bf16 %v553, %v549
        %v742 = vpack.c.bf16 %v555, %v551
        %v743 = vpack.c.bf16 %v563, %v559
        %v744 = vpack.c.bf16 %v565, %v561
        %v761 = vunpack.c.l.b16 %v729
        %v762 = vunpack.c.l.b16 %v730
        %v763 = vunpack.c.h.b16 %v729
        %v764 = vunpack.c.h.b16 %v730
        %v765 = vunpack.c.l.b16 %v731
        %v766 = vunpack.c.l.b16 %v732
        %v767 = vunpack.c.h.b16 %v731
        %v768 = vunpack.c.h.b16 %v732
        %v769 = vunpack.c.l.b16 %v733
        %v770 = vunpack.c.l.b16 %v734
        %v771 = vunpack.c.h.b16 %v733
        %v772 = vunpack.c.h.b16 %v734
        %v773 = vunpack.c.l.b16 %v735
        %v774 = vunpack.c.l.b16 %v736
        %v775 = vunpack.c.h.b16 %v735
        %v776 = vunpack.c.h.b16 %v736
        %v777 = vunpack.c.l.b16 %v737
        %v778 = vunpack.c.l.b16 %v738
        %v779 = vunpack.c.h.b16 %v737
        %v780 = vunpack.c.h.b16 %v738
        %v781 = vunpack.c.l.b16 %v739
        %v782 = vunpack.c.l.b16 %v740
        %v783 = vunpack.c.h.b16 %v739
        %v784 = vunpack.c.h.b16 %v740
        %v785 = vunpack.c.l.b16 %v741
        %v786 = vunpack.c.l.b16 %v742
        %v787 = vunpack.c.h.b16 %v741
        %v788 = vunpack.c.h.b16 %v742
        %v789 = vunpack.c.l.b16 %v743
        %v790 = vunpack.c.l.b16 %v744
        %v791 = vunpack.c.h.b16 %v743
        %v792 = vunpack.c.h.b16 %v744
        %v793 = vpack.c.b16 %v762, %v761
        %v794 = vpack.c.b16 %v764, %v763
        %v795 = vpack.c.b16 %v766, %v765
        %v796 = vpack.c.b16 %v768, %v767
        %v797 = vpack.c.b16 %v770, %v769
        %v798 = vpack.c.b16 %v772, %v771
        %v799 = vpack.c.b16 %v774, %v773
        %v800 = vpack.c.b16 %v776, %v775
        %v801 = vpack.c.b16 %v778, %v777
        %v802 = vpack.c.b16 %v780, %v779
        %v803 = vpack.c.b16 %v782, %v781
        %v804 = vpack.c.b16 %v784, %v783
        %v805 = vpack.c.b16 %v786, %v785
        %v806 = vpack.c.b16 %v788, %v787
        %v807 = vpack.c.b16 %v790, %v789
        %v808 = vpack.c.b16 %v792, %v791
        %825 = vst [vmem:[%s276] sm:$0xff] %v793
        %826 = vst [vmem:[%s276 + $0x8] sm:$0xff] %v794
        %827 = vst [vmem:[%s276 + $0x10] sm:$0xff] %v795
        %828 = vst [vmem:[%s276 + $0x18] sm:$0xff] %v796
        %829 = vst [vmem:[%s276 + $0x20] sm:$0xff] %v797
        %830 = vst [vmem:[%s276 + $0x28] sm:$0xff] %v798
        %831 = vst [vmem:[%s276 + $0x30] sm:$0xff] %v799
        %832 = vst [vmem:[%s276 + $0x38] sm:$0xff] %v800
        %833 = vst [vmem:[%s276 + $0x40] sm:$0xff] %v801
        %834 = vst [vmem:[%s276 + $0x48] sm:$0xff] %v802
        %835 = vst [vmem:[%s276 + $0x50] sm:$0xff] %v803
        %836 = vst [vmem:[%s276 + $0x58] sm:$0xff] %v804
        %837 = vst [vmem:[%s276 + $0x60] sm:$0xff] %v805
        %838 = vst [vmem:[%s276 + $0x68] sm:$0xff] %v806
        %839 = vst [vmem:[%s276 + $0x70] sm:$0xff] %v807
        %840 = vst [vmem:[%s276 + $0x78] sm:$0xff] %v808
        %p841 = scmp.eq.s32.totalorder %s26, 1
        // Predicated region
        $region49: #{tpu_custom_call.1} parent=35 // pred_check
          %p842 = pneg %p841
        $region50: #{tpu_custom_call.1} parent=35 // pred_check_branch
          %844 = sbr.rel (%p842) target = $region52
        $region51: #{tpu_custom_call.1} parent=35 // pred_region
          %v845 = vld [vmem:[#allocation2] sm:$0x3]
          %v846 = vmul.f32 %v845, 0.00390625
          %v847 = vld [vmem:[#allocation3] sm:$0x3]
          %v848 = vmul.f32 %v847, 0.00390625
          %v849 = vmul.f32 %v846, %v846
          %v850 = vsub.f32 %v848, %v849
          %v851 = vmax.f32 %v850, 0.0
          %v852 = vld [vmem:[%s2] sm:$0x3]
          %v853 = vadd.f32 %v851, 1e-05
          %v854 = vrsqrt.pop %v853
          %v855 = vmul.f32 %v852, %v854
          %856 = vst.msk [vmem:[#allocation10] sm:$0x3] %vm632, %v855
          %v857 = vld [vmem:[%s3] sm:$0x3]
          %v858 = vmul.f32 %v846, %v855
          %v859 = vsub.f32 %v857, %v858
          %860 = vst.msk [vmem:[#allocation12] sm:$0x3] %vm632, %v859
        $region52: #{tpu_custom_call.1} parent=35 // pred_fallthru
          _
        %s861 = sand.u32 %s123, 1
        %s862 = scalar_lea.sflag [#allocation6], %s861
        %s863 = sand.u32 %s123, 1
        %s864 = smul.addr %s863, 128
        %s865 = scalar_lea.vmem [#allocation9], %s864
        // Predicated region
        $region53: #{tpu_custom_call.1} parent=35 // pred_check
          %p866 = pneg %p133
        $region54: #{tpu_custom_call.1} parent=35 // pred_check_branch
          %868 = sbr.rel (%p866) target = $region56
        $region55: #{tpu_custom_call.1} parent=35 // pred_region
          %s869 = smul.u32 16, %s26
          %s871 = ssub.s32 2048, 2048
          %872 = vsyncadd %s862, %s871
          %s873 = smul.addr %s869, 2
          %s874 = smul.addr %s873, 64
          %s875 = scalar_lea.hbm %s4, %s874
          %s876 = sshll.u32 %s865, 4
          %s877 = int_to_ptr.vmem [resolvable:$true] %s876
          %882 = dma.vmem_to_hbm [thread:$0]  %s877, 2048, %s875, %s862, 128, 128, 8
        $region56: #{tpu_custom_call.1} parent=35 // pred_fallthru
          _
        // Predicated region
        $region57: #{tpu_custom_call.1} parent=35 // pred_check
          %p883 = pneg %p154
        $region58: #{tpu_custom_call.1} parent=35 // pred_check_branch
          %885 = sbr.rel (%p883) target = $region60
        $region59: #{tpu_custom_call.1} parent=35 // pred_region
          %s887 = ssub.s32 32, 32
          %888 = vsyncadd [#allocation11], %s887
          %s890 = sshll.u32 [#allocation10], 4
          %s891 = int_to_ptr.vmem [resolvable:$true] %s890
          %893 = dma.vmem_to_hbm [thread:$0]  %s891, 32, %s5, [#allocation11]
        $region60: #{tpu_custom_call.1} parent=35 // pred_fallthru
          _
        // Predicated region
        $region61: #{tpu_custom_call.1} parent=35 // pred_check
          %p894 = pneg %p175
        $region62: #{tpu_custom_call.1} parent=35 // pred_check_branch
          %896 = sbr.rel (%p894) target = $region64
        $region63: #{tpu_custom_call.1} parent=35 // pred_region
          %s898 = ssub.s32 32, 32
          %899 = vsyncadd [#allocation11], %s898
          %s901 = sshll.u32 [#allocation12], 4
          %s902 = int_to_ptr.vmem [resolvable:$true] %s901
          %904 = dma.vmem_to_hbm [thread:$0]  %s902, 32, %s6, [#allocation11]
        $region64: #{tpu_custom_call.1} parent=35 // pred_fallthru
          _
        // Predicated region
        $region65: #{tpu_custom_call.1} parent=35 // pred_check
          %p905 = pneg %p154
        $region66: #{tpu_custom_call.1} parent=35 // pred_check_branch
          %907 = sbr.rel (%p905) target = $region68
        $region67: #{tpu_custom_call.1} parent=35 // pred_region
          %908 = dma.done [#allocation11], 32
        $region68: #{tpu_custom_call.1} parent=35 // pred_fallthru
          _
        // Predicated region
        $region69: #{tpu_custom_call.1} parent=35 // pred_check
          %p909 = pneg %p175
        $region70: #{tpu_custom_call.1} parent=35 // pred_check_branch
          %911 = sbr.rel (%p909) target = $region72
        $region71: #{tpu_custom_call.1} parent=35 // pred_region
          %912 = dma.done [#allocation11], 32
        $region72: #{tpu_custom_call.1} parent=35 // pred_fallthru
          _
      $region36: #{tpu_custom_call.1} parent=5 // pred_fallthru
        _
      %p913 = scmp.le.s32.totalorder 2, %s21
      // Predicated region
      $region73: #{tpu_custom_call.1} parent=5 // pred_check
        %p914 = pneg %p913
      $region74: #{tpu_custom_call.1} parent=5 // pred_check_branch
        %916 = sbr.rel (%p914) target = $region76
      $region75: #{tpu_custom_call.1} parent=5 // pred_region
        %s917 = ssub.s32 %s21, 2
        // Predicated region
        $region77: #{tpu_custom_call.1} parent=75 // pred_check
          %p918 = pneg %p139
        $region78: #{tpu_custom_call.1} parent=75 // pred_check_branch
          %920 = sbr.rel (%p918) target = $region80
        $region79: #{tpu_custom_call.1} parent=75 // pred_region
          %s921 = sand.u32 %s124, 1
          %s922 = scalar_lea.sflag [#allocation6], %s921
          %s923 = sand.u32 %s124, 1
          %s924 = smul.addr %s923, 128
          %s925 = scalar_lea.vmem [#allocation9], %s924
          %926 = dma.done %s922, 2048
        $region80: #{tpu_custom_call.1} parent=75 // pred_fallthru
          _
      $region76: #{tpu_custom_call.1} parent=5 // pred_fallthru
        _
    $region6: #{tpu_custom_call.1} parent=1 // loop_footer
      %s25 = sadd.s32 1, %s21
    $region7: #{tpu_custom_call.1} parent=1 // loop_footer_branch
      %20 = sbr.rel target = $region3
    $region8: #{tpu_custom_call.1} parent=1 // loop_exit
      _
    %927 = vsyncpa [#allocation5], 1
    %s928 = scalar_lea.sflag [#allocation5], 1
    %929 = vsyncpa %s928, 1
    %930 = vsyncpa [#allocation8], 1
    %931 = vsyncpa [#allocation6], 1
    %s932 = scalar_lea.sflag [#allocation6], 1
    %933 = vsyncpa %s932, 1
    %934 = vsyncpa [#allocation11], 1

</llo_original>
